<compile_context>
chip_gen: v6e
topology: v6e:2x2x1
jax: 0.10.0
libtpu: 0.0.40
codegen_flags: <defaults>
</compile_context>

<pallas_src>
import jax
import jax.numpy as jnp
from jax.experimental import pallas as pl
from jax.experimental.pallas import tpu as pltpu


def _channel_attention_kernel(x_ref, w1t_ref, b1_ref, w2t_ref, b2_ref, o_ref):
    # x_ref / o_ref : (Bt, C, HW)
    # w1t_ref: (C, Csq)  b1_ref: (1, Csq)  w2t_ref: (Csq, C)  b2_ref: (1, C)
    x = x_ref[...]                                            # (Bt, C, HW)
    inv_hw = 1.0 / x.shape[-1]

    # AdaptiveAvgPool2d(1): mean over spatial (lane axis), accumulate in f32.
    mean = jnp.sum(x.astype(jnp.float32), axis=-1) * inv_hw   # (Bt, C)

    # Conv2d(C, Csq, 1) + ReLU.  Contraction is tiny (C x Csq), so do it on the
    # VPU/XLU (broadcast-multiply + cross-sublane sum) instead of the MXU.
    h = jnp.sum(mean[:, :, None] * w1t_ref[...][None, :, :], axis=1) \
        + b1_ref[...]                                         # (Bt, Csq)
    h = jnp.maximum(h, 0.0)

    # Conv2d(Csq, C, 1) + Sigmoid.
    y = jnp.sum(h[:, :, None] * w2t_ref[...][None, :, :], axis=1) \
        + b2_ref[...]                                         # (Bt, C)
    y = jax.nn.sigmoid(y)

    # Scale input by per-channel attention; lane-dense store over HW.
    o_ref[...] = x * y[:, :, None].astype(x.dtype)


def _choose_batch_tile(B, bytes_per_image,
                       vmem_budget=44 << 20, target_bytes=4 << 20):
    """Pick Bt so the (Bt, C, HW) slab is big (>= ~4 MiB) but the double-
    buffered input+output stays within a v7x-safe VMEM budget, keeping
    at least 2 grid steps when possible (v7x has 2 TensorCores)."""
    # VMEM use ~= 2 buffers x (input + output) x Bt x bytes_per_image.
    max_bt = max(1, vmem_budget // (4 * bytes_per_image))
    want_bt = max(1, target_bytes // bytes_per_image)
    bt = int(max(1, min(B, max_bt, want_bt)))
    if B >= 2:
        bt = min(bt, max(1, B // 2))      # keep >= 2 grid steps for megacore
    while B % bt != 0:                    # Bt must divide B (no partial blocks)
        bt -= 1
    return bt


def channel_attention(x_nchw, w1, b1, w2, b2):
    """x_nchw: (B, C, H, W).  w1: (Csq, C), b1: (Csq,), w2: (C, Csq), b2: (C,).

    Matches: sigmoid(Conv1x1(relu(Conv1x1(avgpool(x))))) * x
    """
    B, C, H, W = x_nchw.shape
    Csq = w1.shape[0]
    HW = H * W
    # NOTE: HW = 256 here is a multiple of 128 (lane-dense stores). For odd
    # H*W this still compiles (full-array block) but stores become masked;
    # pad/refold in the wrapper if that case matters.
    x_flat = x_nchw.reshape(B, C, HW)

    # Pre-transpose weights so the kernel does row-vector-style contractions.
    w1t = jnp.asarray(w1, jnp.float32).T              # (C, Csq)
    w2t = jnp.asarray(w2, jnp.float32).T              # (Csq, C)
    b1r = jnp.asarray(b1, jnp.float32).reshape(1, Csq)
    b2r = jnp.asarray(b2, jnp.float32).reshape(1, C)

    bytes_per_image = C * HW * x_flat.dtype.itemsize
    Bt = _choose_batch_tile(B, bytes_per_image)
    grid = (B // Bt,)

    out_flat = pl.pallas_call(
        _channel_attention_kernel,
        out_shape=jax.ShapeDtypeStruct((B, C, HW), x_flat.dtype),
        grid_spec=pltpu.PrefetchScalarGridSpec(
            num_scalar_prefetch=0,
            grid=grid,
            in_specs=[
                pl.BlockSpec((Bt, C, HW), lambda b: (b, 0, 0)),   # x slab
                pl.BlockSpec((C, Csq), lambda b: (0, 0)),         # w1^T (resident)
                pl.BlockSpec((1, Csq), lambda b: (0, 0)),         # b1   (resident)
                pl.BlockSpec((Csq, C), lambda b: (0, 0)),         # w2^T (resident)
                pl.BlockSpec((1, C), lambda b: (0, 0)),           # b2   (resident)
            ],
            out_specs=pl.BlockSpec((Bt, C, HW), lambda b: (b, 0, 0)),
        ),
        compiler_params=pltpu.CompilerParams(
            dimension_semantics=("parallel",),
            vmem_limit_bytes=64 << 20,      # safe on v7x (64 MiB physical) and below
        ),
    )(x_flat, w1t, b1r, w2t, b2r)

    return out_flat.reshape(B, C, H, W)


def channel_attention_ref(x, w1, b1, w2, b2):
    """Plain-JAX reference for verification."""
    mean = jnp.mean(x.astype(jnp.float32), axis=(2, 3))    # (B, C)
    h = jnp.maximum(mean @ w1.T + b1, 0.0)                 # (B, Csq)
    y = jax.nn.sigmoid(h @ w2.T + b2)                      # (B, C)
    return x * y[:, :, None, None].astype(x.dtype)


if __name__ == "__main__":
    # Small shapes consistent with the module: num_feat=32, squeeze_factor=8.
    B, C, H, W = 4, 32, 16, 16
    squeeze_factor = 8
    Csq = C // squeeze_factor

    key = jax.random.PRNGKey(0)
    kx, kw1, kb1, kw2, kb2 = jax.random.split(key, 5)

    x = jax.random.normal(kx, (B, C, H, W), dtype=jnp.float32)
    # Conv2d(C, Csq, 1) weight is (Csq, C, 1, 1); we keep the squeezed (Csq, C).
    w1 = jax.random.normal(kw1, (Csq, C), dtype=jnp.float32) * 0.1
    b1 = jax.random.normal(kb1, (Csq,), dtype=jnp.float32) * 0.1
    w2 = jax.random.normal(kw2, (C, Csq), dtype=jnp.float32) * 0.1
    b2 = jax.random.normal(kb2, (C,), dtype=jnp.float32) * 0.1

    out = channel_attention(x, w1, b1, w2, b2)
    out = jax.block_until_ready(out)

    ref = channel_attention_ref(x, w1, b1, w2, b2)
    assert out.shape == (B, C, H, W)
    assert jnp.allclose(out, ref, atol=1e-5, rtol=1e-5), "mismatch vs reference"

    print("KERNEL_OK")
</pallas_src>

<mosaic_0001>
module attributes {stable_mosaic.version = 11 : i64} {
  func.func @_channel_attention_kernel(%arg0: i32, %arg1: memref<2x32x256xf32, #tpu.memory_space<vmem>>, %arg2: memref<32x4xf32, #tpu.memory_space<vmem>>, %arg3: memref<1x4xf32, #tpu.memory_space<vmem>>, %arg4: memref<4x32xf32, #tpu.memory_space<vmem>>, %arg5: memref<1x32xf32, #tpu.memory_space<vmem>>, %arg6: memref<2x32x256xf32, #tpu.memory_space<vmem>>) attributes {dimension_semantics = [#tpu.dimension_semantics<parallel>], iteration_bounds = array<i64: 2>, scalar_prefetch = 0 : i64, scratch_operands = 0 : i64, tpu.core_type = #tpu.core_type<tc>, window_params = [{transform_indices = @transform_0, window_bounds = array<i64: 2, 32, 256>}, {pipeline_mode = #tpu.pipeline_mode<synchronous>, transform_indices = @transform_1, window_bounds = array<i64: 32, 4>}, {pipeline_mode = #tpu.pipeline_mode<synchronous>, transform_indices = @transform_2, window_bounds = array<i64: 1, 4>}, {pipeline_mode = #tpu.pipeline_mode<synchronous>, transform_indices = @transform_3, window_bounds = array<i64: 4, 32>}, {pipeline_mode = #tpu.pipeline_mode<synchronous>, transform_indices = @transform_4, window_bounds = array<i64: 1, 32>}, {transform_indices = @transform_5, window_bounds = array<i64: 2, 32, 256>}]} {
    %c0 = arith.constant 0 : index
    %c0_0 = arith.constant 0 : index
    %c0_1 = arith.constant 0 : index
    %0 = vector.load %arg1[%c0, %c0_0, %c0_1] : memref<2x32x256xf32, #tpu.memory_space<vmem>>, vector<2x32x256xf32>
    %cst = arith.constant dense<0.000000e+00> : vector<2x32xf32>
    %1 = vector.multi_reduction <add>, %0, %cst [2] : vector<2x32x256xf32> to vector<2x32xf32>
    %cst_2 = arith.constant 3.906250e-03 : f32
    %2 = vector.broadcast %cst_2 : f32 to vector<2x32xf32>
    %3 = arith.mulf %1, %2 : vector<2x32xf32>
    %4 = vector.shape_cast %3 : vector<2x32xf32> to vector<2x32x1xf32>
    %c0_3 = arith.constant 0 : index
    %c0_4 = arith.constant 0 : index
    %5 = vector.load %arg2[%c0_3, %c0_4] : memref<32x4xf32, #tpu.memory_space<vmem>>, vector<32x4xf32>
    %6 = vector.shape_cast %5 : vector<32x4xf32> to vector<1x32x4xf32>
    %7 = vector.broadcast %4 : vector<2x32x1xf32> to vector<2x32x4xf32>
    %8 = vector.broadcast %6 : vector<1x32x4xf32> to vector<2x32x4xf32>
    %9 = arith.mulf %7, %8 : vector<2x32x4xf32>
    %cst_5 = arith.constant dense<0.000000e+00> : vector<2x4xf32>
    %10 = vector.multi_reduction <add>, %9, %cst_5 [1] : vector<2x32x4xf32> to vector<2x4xf32>
    %c0_6 = arith.constant 0 : index
    %c0_7 = arith.constant 0 : index
    %11 = vector.load %arg3[%c0_6, %c0_7] : memref<1x4xf32, #tpu.memory_space<vmem>>, vector<1x4xf32>
    %12 = vector.broadcast %11 : vector<1x4xf32> to vector<2x4xf32>
    %13 = arith.addf %10, %12 : vector<2x4xf32>
    %cst_8 = arith.constant 0.000000e+00 : f32
    %14 = vector.broadcast %cst_8 : f32 to vector<2x4xf32>
    %15 = arith.maximumf %13, %14 : vector<2x4xf32>
    %16 = vector.shape_cast %15 : vector<2x4xf32> to vector<2x4x1xf32>
    %c0_9 = arith.constant 0 : index
    %c0_10 = arith.constant 0 : index
    %17 = vector.load %arg4[%c0_9, %c0_10] : memref<4x32xf32, #tpu.memory_space<vmem>>, vector<4x32xf32>
    %18 = vector.shape_cast %17 : vector<4x32xf32> to vector<1x4x32xf32>
    %19 = vector.broadcast %16 : vector<2x4x1xf32> to vector<2x4x32xf32>
    %20 = vector.broadcast %18 : vector<1x4x32xf32> to vector<2x4x32xf32>
    %21 = arith.mulf %19, %20 : vector<2x4x32xf32>
    %cst_11 = arith.constant dense<0.000000e+00> : vector<2x32xf32>
    %22 = vector.multi_reduction <add>, %21, %cst_11 [1] : vector<2x4x32xf32> to vector<2x32xf32>
    %c0_12 = arith.constant 0 : index
    %c0_13 = arith.constant 0 : index
    %23 = vector.load %arg5[%c0_12, %c0_13] : memref<1x32xf32, #tpu.memory_space<vmem>>, vector<1x32xf32>
    %24 = vector.broadcast %23 : vector<1x32xf32> to vector<2x32xf32>
    %25 = arith.addf %22, %24 : vector<2x32xf32>
    %26 = arith.negf %25 : vector<2x32xf32>
    %27 = math.exp %26 : vector<2x32xf32>
    %cst_14 = arith.constant 1.000000e+00 : f32
    %28 = vector.broadcast %cst_14 : f32 to vector<2x32xf32>
    %29 = arith.addf %28, %27 : vector<2x32xf32>
    %30 = arith.divf %28, %29 : vector<2x32xf32>
    %31 = vector.shape_cast %30 : vector<2x32xf32> to vector<2x32x1xf32>
    %32 = vector.broadcast %31 : vector<2x32x1xf32> to vector<2x32x256xf32>
    %33 = arith.mulf %0, %32 : vector<2x32x256xf32>
    %c0_15 = arith.constant 0 : index
    %c0_16 = arith.constant 0 : index
    %c0_17 = arith.constant 0 : index
    %34 = vector.load %arg6[%c0_15, %c0_16, %c0_17] : memref<2x32x256xf32, #tpu.memory_space<vmem>>, vector<2x32x256xf32>
    tpu.vector_store %arg6[%c0_15, %c0_16, %c0_17], %33 {strides = array<i32>} : memref<2x32x256xf32, #tpu.memory_space<vmem>>, vector<2x32x256xf32>,
    return
  }
  func.func @transform_0(%arg0: i32) -> (i32, i32, i32) {
    %c0_i32 = arith.constant 0 : i32
    %c0_i32_0 = arith.constant 0 : i32
    %c0_i32_1 = arith.constant 0 : i32
    return %arg0, %c0_i32, %c0_i32_0 : i32, i32, i32
  }
  func.func @transform_1(%arg0: i32) -> (i32, i32) {
    %c0_i32 = arith.constant 0 : i32
    %c0_i32_0 = arith.constant 0 : i32
    %c0_i32_1 = arith.constant 0 : i32
    return %c0_i32, %c0_i32_0 : i32, i32
  }
  func.func @transform_2(%arg0: i32) -> (i32, i32) {
    %c0_i32 = arith.constant 0 : i32
    %c0_i32_0 = arith.constant 0 : i32
    %c0_i32_1 = arith.constant 0 : i32
    return %c0_i32, %c0_i32_0 : i32, i32
  }
  func.func @transform_3(%arg0: i32) -> (i32, i32) {
    %c0_i32 = arith.constant 0 : i32
    %c0_i32_0 = arith.constant 0 : i32
    %c0_i32_1 = arith.constant 0 : i32
    return %c0_i32, %c0_i32_0 : i32, i32
  }
  func.func @transform_4(%arg0: i32) -> (i32, i32) {
    %c0_i32 = arith.constant 0 : i32
    %c0_i32_0 = arith.constant 0 : i32
    %c0_i32_1 = arith.constant 0 : i32
    return %c0_i32, %c0_i32_0 : i32, i32
  }
  func.func @transform_5(%arg0: i32) -> (i32, i32, i32) {
    %c0_i32 = arith.constant 0 : i32
    %c0_i32_0 = arith.constant 0 : i32
    %c0_i32_1 = arith.constant 0 : i32
    return %arg0, %c0_i32, %c0_i32_0 : i32, i32, i32
  }
}

</mosaic_0001>

<llo_original>
// kernel: tpu_custom_call.1
$region0: #{tpu_custom_call.1}
  #allocation0 [shape = 'u32[]', space=smem, size = 0x4, offset = 0x4, fixed_abs, tag = 'smem constant byte address 0x4 - core index']
  #allocation1 [shape = 'u32[144,128]{1,0:T(1,128)}', space=vmem, size = 0x12000, scoped, tag = 'internal scratch']
  %s0 = inlined_call_operand.hbm [shape: f32[4,32,256], index: 0, kind: input, shape index: {}]
  %s1 = inlined_call_operand.vmem [shape: f32[32,4], index: 1, kind: input, shape index: {}]
  %s2 = inlined_call_operand.vmem [shape: f32[1,4], index: 2, kind: input, shape index: {}]
  %s3 = inlined_call_operand.vmem [shape: f32[4,32], index: 3, kind: input, shape index: {}]
  %s4 = inlined_call_operand.vmem [shape: f32[1,32], index: 4, kind: input, shape index: {}]
  %s5 = inlined_call_operand.hbm [shape: f32[4,32,256], index: 5, kind: output, shape index: {}]
  %s6 = sld [smem:[#allocation0]]
  $region57: #{tpu_custom_call.1} parent=0
    _
  %s8 = ssub.s32 1, %s6
  %s9 = scalar_select 0, %s8, %s6
  $region1: #{tpu_custom_call.1} parent=0
    #allocation2 [shape = 'u8[131072]{0}', space=vmem, size = 0x20000, scoped, tag = 'input window, operand 0']
    #allocation3 [shape = 's32[2]{0}', space=sflag, size = 0x8, scoped, tag = 'scoped memory for tpu_custom_call.1']
    #allocation4 [shape = 's32[2]{0}', space=sflag, size = 0x8, scoped, tag = 'scoped memory for tpu_custom_call.1']
    #allocation5 [shape = 'u8[131072]{0}', space=vmem, size = 0x20000, scoped, tag = 'output window, operand 0']
    %10 = vsyncpa [#allocation3], 0
    %s11 = scalar_lea.sflag [#allocation3], 1
    %12 = vsyncpa %s11, 0
    %13 = vsyncpa [#allocation4], 0
    %s14 = scalar_lea.sflag [#allocation4], 1
    %15 = vsyncpa %s14, 0
    loop: start=0, step=1, limit=4
    $region2: #{tpu_custom_call.1} parent=1 // loop_pre_header
      _
    $region3: #{tpu_custom_call.1} parent=1 // loop_header
      %s17 = sphi 0, %s21
      %p18 = scmp.ge.s32.totalorder %s17, 4
      %s27 = sphi 0, %s29
      %s30 = sphi 0, %s27
      %s31 = sphi 0, %s30
      %s47 = sphi 0, %s31
      %s51 = sphi 0, %s51
      %s53 = sphi 0, %s51
      %s54 = sphi 0, %s53
      %s68 = sphi 0, %s54
      %s72 = sphi 0, %s72
      %s74 = sphi 0, %s72
      %s75 = sphi 0, %s74
      %s89 = sphi 0, %s75
      %s93 = sphi 0, %s93
      %s95 = sphi 0, %s93
      %s96 = sphi 0, %s95
      %s110 = sphi 0, %s96
      %s114 = sphi 0, %s114
      %s116 = sphi 0, %s114
      %s117 = sphi 0, %s116
      %s131 = sphi 0, %s117
      %s137 = sphi 0, %s139
      %s140 = sphi 0, %s137
      %s141 = sphi 0, %s140
      %s157 = sphi 0, %s141
    $region4: #{tpu_custom_call.1} parent=1 // loop_header_branch
      %20 = sbr.rel (%p18) target = $region8
    $region5: #{tpu_custom_call.1} parent=1 // loop_body
      %s22 = ssub.s32 %s17, 1
      %s23 = ssub.s32 %s17, 2
      %s24 = sadd.s32 %s17, 1
      %s25 = ssub.s32 %s17, %s24
      %p26 = scmp.eq.s32.totalorder %s25, 0
      %s28 = sadd.s32 %s27, 1
      %s29 = scalar_select %p26, %s27, %s28
      %p32 = pneg %p26
      %p33 = scmp.eq.s32.totalorder %s17, 1
      %p34 = por %p32, %p33
      %p35 = scmp.ne.s32.totalorder %s27, %s30
      %p36 = scmp.eq.s32.totalorder %s17, 0
      %p37 = por %p35, %p36
      %p38 = scmp.ne.s32.totalorder %s27, %s30
      %p39 = scmp.eq.s32.totalorder %s22, 1
      %p40 = por %p38, %p39
      %p41 = scmp.ne.s32.totalorder %s30, %s31
      %p42 = scmp.eq.s32.totalorder %s22, 0
      %p43 = por %p41, %p42
      %p44 = scmp.ne.s32.totalorder %s30, %s31
      %p45 = scmp.eq.s32.totalorder %s23, 1
      %p46 = por %p44, %p45
      %p48 = scmp.ne.s32.totalorder %s31, %s47
      %p49 = scmp.eq.s32.totalorder %s23, 0
      %p50 = por %p48, %p49
      %s52 = sadd.s32 %s51, 1
      %p55 = scmp.eq.s32.totalorder %s17, 1
      %p56 = scmp.ne.s32.totalorder %s51, %s53
      %p57 = scmp.eq.s32.totalorder %s17, 0
      %p58 = por %p56, %p57
      %p59 = scmp.ne.s32.totalorder %s51, %s53
      %p60 = scmp.eq.s32.totalorder %s22, 1
      %p61 = por %p59, %p60
      %p62 = scmp.ne.s32.totalorder %s53, %s54
      %p63 = scmp.eq.s32.totalorder %s22, 0
      %p64 = por %p62, %p63
      %p65 = scmp.ne.s32.totalorder %s53, %s54
      %p66 = scmp.eq.s32.totalorder %s23, 1
      %p67 = por %p65, %p66
      %p69 = scmp.ne.s32.totalorder %s54, %s68
      %p70 = scmp.eq.s32.totalorder %s23, 0
      %p71 = por %p69, %p70
      %s73 = sadd.s32 %s72, 1
      %p76 = scmp.eq.s32.totalorder %s17, 1
      %p77 = scmp.ne.s32.totalorder %s72, %s74
      %p78 = scmp.eq.s32.totalorder %s17, 0
      %p79 = por %p77, %p78
      %p80 = scmp.ne.s32.totalorder %s72, %s74
      %p81 = scmp.eq.s32.totalorder %s22, 1
      %p82 = por %p80, %p81
      %p83 = scmp.ne.s32.totalorder %s74, %s75
      %p84 = scmp.eq.s32.totalorder %s22, 0
      %p85 = por %p83, %p84
      %p86 = scmp.ne.s32.totalorder %s74, %s75
      %p87 = scmp.eq.s32.totalorder %s23, 1
      %p88 = por %p86, %p87
      %p90 = scmp.ne.s32.totalorder %s75, %s89
      %p91 = scmp.eq.s32.totalorder %s23, 0
      %p92 = por %p90, %p91
      %s94 = sadd.s32 %s93, 1
      %p97 = scmp.eq.s32.totalorder %s17, 1
      %p98 = scmp.ne.s32.totalorder %s93, %s95
      %p99 = scmp.eq.s32.totalorder %s17, 0
      %p100 = por %p98, %p99
      %p101 = scmp.ne.s32.totalorder %s93, %s95
      %p102 = scmp.eq.s32.totalorder %s22, 1
      %p103 = por %p101, %p102
      %p104 = scmp.ne.s32.totalorder %s95, %s96
      %p105 = scmp.eq.s32.totalorder %s22, 0
      %p106 = por %p104, %p105
      %p107 = scmp.ne.s32.totalorder %s95, %s96
      %p108 = scmp.eq.s32.totalorder %s23, 1
      %p109 = por %p107, %p108
      %p111 = scmp.ne.s32.totalorder %s96, %s110
      %p112 = scmp.eq.s32.totalorder %s23, 0
      %p113 = por %p111, %p112
      %s115 = sadd.s32 %s114, 1
      %p118 = scmp.eq.s32.totalorder %s17, 1
      %p119 = scmp.ne.s32.totalorder %s114, %s116
      %p120 = scmp.eq.s32.totalorder %s17, 0
      %p121 = por %p119, %p120
      %p122 = scmp.ne.s32.totalorder %s114, %s116
      %p123 = scmp.eq.s32.totalorder %s22, 1
      %p124 = por %p122, %p123
      %p125 = scmp.ne.s32.totalorder %s116, %s117
      %p126 = scmp.eq.s32.totalorder %s22, 0
      %p127 = por %p125, %p126
      %p128 = scmp.ne.s32.totalorder %s116, %s117
      %p129 = scmp.eq.s32.totalorder %s23, 1
      %p130 = por %p128, %p129
      %p132 = scmp.ne.s32.totalorder %s117, %s131
      %p133 = scmp.eq.s32.totalorder %s23, 0
      %p134 = por %p132, %p133
      %s135 = ssub.s32 %s17, %s24
      %p136 = scmp.eq.s32.totalorder %s135, 0
      %s138 = sadd.s32 %s137, 1
      %s139 = scalar_select %p136, %s137, %s138
      %p142 = pneg %p136
      %p143 = scmp.eq.s32.totalorder %s17, 1
      %p144 = por %p142, %p143
      %p145 = scmp.ne.s32.totalorder %s137, %s140
      %p146 = scmp.eq.s32.totalorder %s17, 0
      %p147 = por %p145, %p146
      %p148 = scmp.ne.s32.totalorder %s137, %s140
      %p149 = scmp.eq.s32.totalorder %s22, 1
      %p150 = por %p148, %p149
      %p151 = scmp.ne.s32.totalorder %s140, %s141
      %p152 = scmp.eq.s32.totalorder %s22, 0
      %p153 = por %p151, %p152
      %p154 = scmp.ne.s32.totalorder %s140, %s141
      %p155 = scmp.eq.s32.totalorder %s23, 1
      %p156 = por %p154, %p155
      %p158 = scmp.ne.s32.totalorder %s141, %s157
      %p159 = scmp.eq.s32.totalorder %s23, 0
      %p160 = por %p158, %p159
      %p161 = scmp.le.s32.totalorder 1, %s17
      %p162 = scmp.lt.s32.totalorder %s17, 3
      %p163 = pnand %p161, %p162
      %p164 = pneg %p163
      // Predicated region
      $region9: #{tpu_custom_call.1} parent=5 // pred_check
        _
      $region10: #{tpu_custom_call.1} parent=5 // pred_check_branch
        %166 = sbr.rel (%p163) target = $region12
      $region11: #{tpu_custom_call.1} parent=5 // pred_region
        %s167 = ssub.s32 %s17, 1
        // Predicated region
        $region13: #{tpu_custom_call.1} parent=11 // pred_check
          %p168 = pneg %p64
        $region14: #{tpu_custom_call.1} parent=11 // pred_check_branch
          %170 = sbr.rel (%p168) target = $region16
        $region15: #{tpu_custom_call.1} parent=11 // pred_region
          _
        $region16: #{tpu_custom_call.1} parent=11 // pred_fallthru
          _
        // Predicated region
        $region17: #{tpu_custom_call.1} parent=11 // pred_check
          %p171 = pneg %p85
        $region18: #{tpu_custom_call.1} parent=11 // pred_check_branch
          %173 = sbr.rel (%p171) target = $region20
        $region19: #{tpu_custom_call.1} parent=11 // pred_region
          _
        $region20: #{tpu_custom_call.1} parent=11 // pred_fallthru
          _
        // Predicated region
        $region21: #{tpu_custom_call.1} parent=11 // pred_check
          %p174 = pneg %p106
        $region22: #{tpu_custom_call.1} parent=11 // pred_check_branch
          %176 = sbr.rel (%p174) target = $region24
        $region23: #{tpu_custom_call.1} parent=11 // pred_region
          _
        $region24: #{tpu_custom_call.1} parent=11 // pred_fallthru
          _
        // Predicated region
        $region25: #{tpu_custom_call.1} parent=11 // pred_check
          %p177 = pneg %p127
        $region26: #{tpu_custom_call.1} parent=11 // pred_check_branch
          %179 = sbr.rel (%p177) target = $region28
        $region27: #{tpu_custom_call.1} parent=11 // pred_region
          _
        $region28: #{tpu_custom_call.1} parent=11 // pred_fallthru
          _
      $region12: #{tpu_custom_call.1} parent=5 // pred_fallthru
        _
      %p180 = scmp.lt.s32.totalorder %s17, 2
      // Predicated region
      $region29: #{tpu_custom_call.1} parent=5 // pred_check
        %p181 = pneg %p180
      $region30: #{tpu_custom_call.1} parent=5 // pred_check_branch
        %183 = sbr.rel (%p181) target = $region32
      $region31: #{tpu_custom_call.1} parent=5 // pred_region
        // Predicated region
        $region33: #{tpu_custom_call.1} parent=31 // pred_check
          %p184 = pneg %p37
        $region34: #{tpu_custom_call.1} parent=31 // pred_check_branch
          %186 = sbr.rel (%p184) target = $region36
        $region35: #{tpu_custom_call.1} parent=31 // pred_region
          %s187 = sand.u32 %s27, 1
          %s188 = scalar_lea.sflag [#allocation3], %s187
          %s189 = sand.u32 %s27, 1
          %s190 = smul.addr %s189, 128
          %s191 = scalar_lea.vmem [#allocation2], %s190
          %s192 = smul.u32 2, %s17
          %s194 = ssub.s32 2048, 2048
          %195 = vsyncadd %s188, %s194
          %s196 = smul.addr %s192, 8
          %s197 = smul.addr %s196, 128
          %s198 = scalar_lea.hbm %s0, %s197
          %s199 = sshll.u32 %s191, 4
          %s200 = int_to_ptr.vmem [resolvable:$true] %s199
          %205 = dma.hbm_to_vmem [thread:$0]  %s198, 2048, %s200, %s188, 256, 256, 16
        $region36: #{tpu_custom_call.1} parent=31 // pred_fallthru
          _
      $region32: #{tpu_custom_call.1} parent=5 // pred_fallthru
        _
      %p206 = scmp.le.s32.totalorder 1, %s17
      %p207 = scmp.lt.s32.totalorder %s17, 3
      %p208 = pnand %p206, %p207
      %p209 = pneg %p208
      // Predicated region
      $region37: #{tpu_custom_call.1} parent=5 // pred_check
        _
      $region38: #{tpu_custom_call.1} parent=5 // pred_check_branch
        %211 = sbr.rel (%p208) target = $region40
      $region39: #{tpu_custom_call.1} parent=5 // pred_region
        %s212 = ssub.s32 %s17, 1
        %s213 = sand.u32 %s30, 1
        %s214 = scalar_lea.sflag [#allocation3], %s213
        %s215 = sand.u32 %s30, 1
        %s216 = smul.addr %s215, 128
        %s217 = scalar_lea.vmem [#allocation2], %s216
        // Predicated region
        $region41: #{tpu_custom_call.1} parent=39 // pred_check
          %p218 = pneg %p43
        $region42: #{tpu_custom_call.1} parent=39 // pred_check_branch
          %220 = sbr.rel (%p218) target = $region44
        $region43: #{tpu_custom_call.1} parent=39 // pred_region
          %221 = dma.done %s214, 2048
        $region44: #{tpu_custom_call.1} parent=39 // pred_fallthru
          _
        %s222 = sand.u32 %s30, 1
        %s223 = scalar_lea.sflag [#allocation3], %s222
        %s224 = sand.u32 %s30, 1
        %s225 = smul.addr %s224, 128
        %s226 = scalar_lea.vmem [#allocation2], %s225
        %p227 = pneg %p43
        %p228 = pneg %p40
        %p229 = pneg %p64
        %p230 = pneg %p61
        %p231 = pneg %p85
        %p232 = pneg %p82
        %p233 = pneg %p106
        %p234 = pneg %p103
        %p235 = pneg %p127
        %p236 = pneg %p124
        %p237 = pneg %p153
        %p238 = pneg %p150
        %s239 = sand.u32 %s140, 1
        %s240 = scalar_lea.sflag [#allocation4], %s239
        %s241 = sand.u32 %s140, 1
        %s242 = smul.addr %s241, 128
        %s243 = scalar_lea.vmem [#allocation5], %s242
        %s244 = smul.u32 2, %s22
        %s245 = smul.u32 2, %s22
        %v246 = vld [vmem:[%s217] sm:$0xff]
        %v247 = vld [vmem:[%s217 + $0x8] sm:$0xff]
        %v248 = vld [vmem:[%s217 + $0x10] sm:$0xff]
        %v249 = vld [vmem:[%s217 + $0x18] sm:$0xff]
        %v250 = vld [vmem:[%s217 + $0x20] sm:$0xff]
        %v251 = vld [vmem:[%s217 + $0x28] sm:$0xff]
        %v252 = vld [vmem:[%s217 + $0x30] sm:$0xff]
        %v253 = vld [vmem:[%s217 + $0x38] sm:$0xff]
        %v254 = vld [vmem:[%s217 + $0x40] sm:$0xff]
        %v255 = vld [vmem:[%s217 + $0x48] sm:$0xff]
        %v256 = vld [vmem:[%s217 + $0x50] sm:$0xff]
        %v257 = vld [vmem:[%s217 + $0x58] sm:$0xff]
        %v258 = vld [vmem:[%s217 + $0x60] sm:$0xff]
        %v259 = vld [vmem:[%s217 + $0x68] sm:$0xff]
        %v260 = vld [vmem:[%s217 + $0x70] sm:$0xff]
        %v261 = vld [vmem:[%s217 + $0x78] sm:$0xff]
        %v262 = vadd.f32 %v246, %v247
        %263 = vadd.xlane.f32.xlu0 %v262
        %v264 = vpop.xlane.xlu0 %263
        %v265 = vadd.f32 %v248, %v249
        %266 = vadd.xlane.f32.xlu0 %v265
        %v267 = vpop.xlane.xlu0 %266
        %v268 = vadd.f32 %v250, %v251
        %269 = vadd.xlane.f32.xlu0 %v268
        %v270 = vpop.xlane.xlu0 %269
        %v271 = vadd.f32 %v252, %v253
        %272 = vadd.xlane.f32.xlu0 %v271
        %v273 = vpop.xlane.xlu0 %272
        %v274 = vadd.f32 %v254, %v255
        %275 = vadd.xlane.f32.xlu0 %v274
        %v276 = vpop.xlane.xlu0 %275
        %v277 = vadd.f32 %v256, %v257
        %278 = vadd.xlane.f32.xlu0 %v277
        %v279 = vpop.xlane.xlu0 %278
        %v280 = vadd.f32 %v258, %v259
        %281 = vadd.xlane.f32.xlu0 %v280
        %v282 = vpop.xlane.xlu0 %281
        %v283 = vadd.f32 %v260, %v261
        %284 = vadd.xlane.f32.xlu0 %v283
        %v285 = vpop.xlane.xlu0 %284
        %v286 = vmul.f32 %v264, 0.00390625
        %v287 = vmul.f32 %v267, 0.00390625
        %v288 = vmul.f32 %v270, 0.00390625
        %v289 = vmul.f32 %v273, 0.00390625
        %v290 = vmul.f32 %v276, 0.00390625
        %v291 = vmul.f32 %v279, 0.00390625
        %v292 = vmul.f32 %v282, 0.00390625
        %v293 = vmul.f32 %v285, 0.00390625
        %v294 = vld [vmem:[%s1] sm:$0xff]
        %v295 = vld [vmem:[%s1 + $0x8] sm:$0xff]
        %v296 = vld [vmem:[%s1 + $0x10] sm:$0xff]
        %v297 = vld [vmem:[%s1 + $0x18] sm:$0xff]
        %v298 = vmul.f32 %v286, %v294
        %v299 = vmul.f32 %v287, %v295
        %v300 = vmul.f32 %v288, %v296
        %v301 = vmul.f32 %v289, %v297
        %v302 = vmul.f32 %v290, %v294
        %v303 = vmul.f32 %v291, %v295
        %v304 = vmul.f32 %v292, %v296
        %v305 = vmul.f32 %v293, %v297
        %vm306 = vcmask 31744
        %v307 = vsel %vm306, %v298, 0.0
        %v308 = vsel %vm306, %v299, 0.0
        %v309 = vadd.f32 %v307, %v308
        %v310 = vsel %vm306, %v300, 0.0
        %v311 = vadd.f32 %v309, %v310
        %v312 = vsel %vm306, %v301, 0.0
        %v313 = vadd.f32 %v311, %v312
        %v314 = vrot.slane %v313, 4
        %v315 = vadd.f32 %v313, %v314
        %v316 = vrot.slane %v315, 2
        %v317 = vadd.f32 %v315, %v316
        %v318 = vrot.slane %v317, 1
        %v319 = vadd.f32 %v317, %v318
        %v320 = vsel %vm306, %v302, 0.0
        %v321 = vsel %vm306, %v303, 0.0
        %v322 = vadd.f32 %v320, %v321
        %v323 = vsel %vm306, %v304, 0.0
        %v324 = vadd.f32 %v322, %v323
        %v325 = vsel %vm306, %v305, 0.0
        %v326 = vadd.f32 %v324, %v325
        %v327 = vrot.slane %v326, 4
        %v328 = vadd.f32 %v326, %v327
        %v329 = vrot.slane %v328, 2
        %v330 = vadd.f32 %v328, %v329
        %v331 = vrot.slane %v330, 1
        %v332 = vadd.f32 %v330, %v331
        %v333 = vld [vmem:[%s2] sm:$0x1]
        %v335 = vlaneseq
        %v336 = vshrl.u32 %v335, 7
        %v337 = vsub.s32 0, %v336
        %v338 = vrot.slane %v333, %v337
        %v340 = vadd.f32 %v319, %v338
        %v341 = vadd.f32 %v332, %v338
        %v342 = vmax.f32 %v340, 0.0
        %v343 = vmax.f32 %v341, 0.0
        %v344 = vlaneseq
        %v345 = vshrl.u32 %v344, 7
        %v346 = vsub.s32 0, %v345
        %v347 = vrot.slane %v342, %v346
        %349 = vbcast.lane.b32.xlu0 %v347, 256
        %v350 = vpop.permute.xlu0 %349
        %v351 = vlaneseq
        %v352 = vshrl.u32 %v351, 7
        %v353 = vsub.s32 0, %v352
        %v354 = vrot.slane %v343, %v353
        %356 = vbcast.lane.b32.xlu0 %v354, 256
        %v357 = vpop.permute.xlu0 %356
        %v358 = vld [vmem:[%s3] sm:$0xf]
        %v359 = vmul.f32 %v350, %v358
        %v360 = vmul.f32 %v357, %v358
        %vm361 = vcmask 257024
        %v362 = vsel %vm361, %v359, 0.0
        %v363 = vrot.slane %v362, 4
        %v364 = vadd.f32 %v362, %v363
        %v365 = vrot.slane %v364, 2
        %v366 = vadd.f32 %v364, %v365
        %v367 = vrot.slane %v366, 1
        %v368 = vadd.f32 %v366, %v367
        %v369 = vsel %vm361, %v360, 0.0
        %v370 = vrot.slane %v369, 4
        %v371 = vadd.f32 %v369, %v370
        %v372 = vrot.slane %v371, 2
        %v373 = vadd.f32 %v371, %v372
        %v374 = vrot.slane %v373, 1
        %v375 = vadd.f32 %v373, %v374
        %v376 = vld [vmem:[%s4] sm:$0x1]
        %v378 = vlaneseq
        %v379 = vshrl.u32 %v378, 7
        %v380 = vsub.s32 0, %v379
        %v381 = vrot.slane %v376, %v380
        %v383 = vadd.f32 %v368, %v381
        %v384 = vadd.f32 %v375, %v381
        %v385 = vxor.u32 %v383, 2147483648
        %v386 = vxor.u32 %v384, 2147483648
        %v387 = vmul.f32 %v385, 1.442695
        %v388 = vpow.pop %v387
        %v389 = vmul.f32 %v386, 1.442695
        %v390 = vpow.pop %v389
        %v391 = vadd.f32 %v388, 1.0
        %v392 = vadd.f32 %v390, 1.0
        %v393 = vrcp.pop %v391
        %v394 = vmul.f32 1.0, %v393
        %v395 = vrcp.pop %v392
        %v396 = vmul.f32 1.0, %v395
        %v397 = vlaneseq
        %v398 = vshrl.u32 %v397, 7
        %v399 = vsub.s32 0, %v398
        %v400 = vrot.slane %v394, %v399
        %402 = vbcast.lane.b32.xlu0 %v400, 256
        %v403 = vpop.permute.xlu0 %402
        %s405 = sor.u32 256, 8
        %406 = vbcast.lane.b32.xlu0 %v400, %s405
        %v407 = vpop.permute.xlu0 %406
        %s409 = sor.u32 256, 16
        %410 = vbcast.lane.b32.xlu0 %v400, %s409
        %v411 = vpop.permute.xlu0 %410
        %s413 = sor.u32 256, 24
        %414 = vbcast.lane.b32.xlu0 %v400, %s413
        %v415 = vpop.permute.xlu0 %414
        %v416 = vlaneseq
        %v417 = vshrl.u32 %v416, 7
        %v418 = vsub.s32 0, %v417
        %v419 = vrot.slane %v396, %v418
        %421 = vbcast.lane.b32.xlu0 %v419, 256
        %v422 = vpop.permute.xlu0 %421
        %s424 = sor.u32 256, 8
        %425 = vbcast.lane.b32.xlu0 %v419, %s424
        %v426 = vpop.permute.xlu0 %425
        %s428 = sor.u32 256, 16
        %429 = vbcast.lane.b32.xlu0 %v419, %s428
        %v430 = vpop.permute.xlu0 %429
        %s432 = sor.u32 256, 24
        %433 = vbcast.lane.b32.xlu0 %v419, %s432
        %v434 = vpop.permute.xlu0 %433
        %v435 = vmul.f32 %v246, %v403
        %v436 = vmul.f32 %v247, %v403
        %v437 = vmul.f32 %v248, %v407
        %v438 = vmul.f32 %v249, %v407
        %v439 = vmul.f32 %v250, %v411
        %v440 = vmul.f32 %v251, %v411
        %v441 = vmul.f32 %v252, %v415
        %v442 = vmul.f32 %v253, %v415
        %v443 = vmul.f32 %v254, %v422
        %v444 = vmul.f32 %v255, %v422
        %v445 = vmul.f32 %v256, %v426
        %v446 = vmul.f32 %v257, %v426
        %v447 = vmul.f32 %v258, %v430
        %v448 = vmul.f32 %v259, %v430
        %v449 = vmul.f32 %v260, %v434
        %v450 = vmul.f32 %v261, %v434
        %451 = vst [vmem:[%s243] sm:$0xff] %v435
        %452 = vst [vmem:[%s243 + $0x8] sm:$0xff] %v436
        %453 = vst [vmem:[%s243 + $0x10] sm:$0xff] %v437
        %454 = vst [vmem:[%s243 + $0x18] sm:$0xff] %v438
        %455 = vst [vmem:[%s243 + $0x20] sm:$0xff] %v439
        %456 = vst [vmem:[%s243 + $0x28] sm:$0xff] %v440
        %457 = vst [vmem:[%s243 + $0x30] sm:$0xff] %v441
        %458 = vst [vmem:[%s243 + $0x38] sm:$0xff] %v442
        %459 = vst [vmem:[%s243 + $0x40] sm:$0xff] %v443
        %460 = vst [vmem:[%s243 + $0x48] sm:$0xff] %v444
        %461 = vst [vmem:[%s243 + $0x50] sm:$0xff] %v445
        %462 = vst [vmem:[%s243 + $0x58] sm:$0xff] %v446
        %463 = vst [vmem:[%s243 + $0x60] sm:$0xff] %v447
        %464 = vst [vmem:[%s243 + $0x68] sm:$0xff] %v448
        %465 = vst [vmem:[%s243 + $0x70] sm:$0xff] %v449
        %466 = vst [vmem:[%s243 + $0x78] sm:$0xff] %v450
        %s467 = sand.u32 %s140, 1
        %s468 = scalar_lea.sflag [#allocation4], %s467
        %s469 = sand.u32 %s140, 1
        %s470 = smul.addr %s469, 128
        %s471 = scalar_lea.vmem [#allocation5], %s470
        // Predicated region
        $region45: #{tpu_custom_call.1} parent=39 // pred_check
          %p472 = pneg %p150
        $region46: #{tpu_custom_call.1} parent=39 // pred_check_branch
          %474 = sbr.rel (%p472) target = $region48
        $region47: #{tpu_custom_call.1} parent=39 // pred_region
          %s475 = smul.u32 2, %s22
          %s477 = ssub.s32 2048, 2048
          %478 = vsyncadd %s468, %s477
          %s479 = smul.addr %s475, 8
          %s480 = smul.addr %s479, 128
          %s481 = scalar_lea.hbm %s5, %s480
          %s482 = sshll.u32 %s471, 4
          %s483 = int_to_ptr.vmem [resolvable:$true] %s482
          %488 = dma.vmem_to_hbm [thread:$0]  %s483, 2048, %s481, %s468, 256, 256, 16
        $region48: #{tpu_custom_call.1} parent=39 // pred_fallthru
          _
      $region40: #{tpu_custom_call.1} parent=5 // pred_fallthru
        _
      %p489 = scmp.le.s32.totalorder 2, %s17
      // Predicated region
      $region49: #{tpu_custom_call.1} parent=5 // pred_check
        %p490 = pneg %p489
      $region50: #{tpu_custom_call.1} parent=5 // pred_check_branch
        %492 = sbr.rel (%p490) target = $region52
      $region51: #{tpu_custom_call.1} parent=5 // pred_region
        %s493 = ssub.s32 %s17, 2
        // Predicated region
        $region53: #{tpu_custom_call.1} parent=51 // pred_check
          %p494 = pneg %p156
        $region54: #{tpu_custom_call.1} parent=51 // pred_check_branch
          %496 = sbr.rel (%p494) target = $region56
        $region55: #{tpu_custom_call.1} parent=51 // pred_region
          %s497 = sand.u32 %s141, 1
          %s498 = scalar_lea.sflag [#allocation4], %s497
          %s499 = sand.u32 %s141, 1
          %s500 = smul.addr %s499, 128
          %s501 = scalar_lea.vmem [#allocation5], %s500
          %502 = dma.done %s498, 2048
        $region56: #{tpu_custom_call.1} parent=51 // pred_fallthru
          _
      $region52: #{tpu_custom_call.1} parent=5 // pred_fallthru
        _
    $region6: #{tpu_custom_call.1} parent=1 // loop_footer
      %s21 = sadd.s32 1, %s17
    $region7: #{tpu_custom_call.1} parent=1 // loop_footer_branch
      %16 = sbr.rel target = $region3
    $region8: #{tpu_custom_call.1} parent=1 // loop_exit
      _
    %503 = vsyncpa [#allocation3], 1
    %s504 = scalar_lea.sflag [#allocation3], 1
    %505 = vsyncpa %s504, 1
    %506 = vsyncpa [#allocation4], 1
    %s507 = scalar_lea.sflag [#allocation4], 1
    %508 = vsyncpa %s507, 1

</llo_original>
